<compile_context>
chip_gen: v7x
topology: tpu7x:2x2x1
jax: 0.10.0
libtpu: 0.0.40
codegen_flags: <defaults>
</compile_context>

<pallas_src>
import jax
import jax.numpy as jnp
from jax.experimental import pallas as pl
from jax.experimental.pallas import tpu as pltpu

_LANES = 1024  # lane-dense last dim (8 vregs wide, multiple of 128)


def _affine_kernel(w_ref, b_ref, x_ref, o_ref):
    # w_ref/b_ref: (1,) f32 scalars in SMEM (scalar prefetch).
    # x_ref/o_ref: (tm, _LANES) lane-dense tiles in VMEM.
    w = w_ref[0]
    b = b_ref[0]
    x = x_ref[...].astype(jnp.float32)         # fma in f32, cast only on store
    o_ref[...] = (x * w + b).astype(o_ref.dtype)


def _pick_tile_rows_and_vmem_limit():
    """Per-TPU-generation tile height (rows) and scoped-VMEM limit."""
    kind = ""
    try:
        kind = jax.devices()[0].device_kind.lower()
    except Exception:
        pass
    if "v5" in kind:               # v5e/v5p: conservative (v5e scoped default 16 MiB)
        return 512, 24 << 20       # 2 MiB in-block; 8 MiB total double-buffered
    if "7" in kind:                # v7x: 64 MiB physical / 32 MiB scoped default
        return 2048, 40 << 20      # 8 MiB in-block; 32 MiB total -> raise limit
    return 1024, 32 << 20          # v6e & default: 4 MiB in-block; 16 MiB total


def linear1(x: jax.Array, weight: jax.Array, bias: jax.Array) -> jax.Array:
    """Pallas equivalent of nn.Linear(1, 1) applied to x of shape [..., 1]."""
    assert weight.shape == (1, 1), f"expected (1,1) weight, got {weight.shape}"
    assert bias.shape == (1,), f"expected (1,) bias, got {bias.shape}"

    # Scalars stay f32 in SMEM (always supported).
    w_flat = weight.reshape((1,)).astype(jnp.float32)
    b_flat = bias.reshape((1,)).astype(jnp.float32)

    orig_shape = x.shape
    flat = x.reshape(-1)
    n = flat.shape[0]
    if n == 0:  # degenerate empty input
        return x

    # Lane-dense re-layout: pad ONLY the sub-_LANES tail (<= _LANES-1 elems).
    rows = pl.cdiv(n, _LANES)
    padded = rows * _LANES
    if padded != n:
        flat = jnp.pad(flat, (0, padded - n))
    x2d = flat.reshape(rows, _LANES)

    tm_target, vmem_limit = _pick_tile_rows_and_vmem_limit()
    if rows <= 8:
        tm = rows                              # block equals full sublane dim
    else:
        tm = min(tm_target, (rows // 8) * 8)   # multiple of 8, <= rows
        if rows >= 32:
            # Keep >= 4 grid steps so the 'parallel' axis balances v7x's 2 TCs.
            tm = min(tm, max(8, (rows // 4) // 8 * 8))
    grid = (pl.cdiv(rows, tm),)                # partial boundary block is masked

    out2d = pl.pallas_call(
        _affine_kernel,
        out_shape=jax.ShapeDtypeStruct((rows, _LANES), x.dtype),
        grid_spec=pltpu.PrefetchScalarGridSpec(
            num_scalar_prefetch=2,  # w, b -> SMEM, passed first to the kernel
            grid=grid,
            in_specs=[pl.BlockSpec((tm, _LANES), lambda i, w, b: (i, 0))],
            out_specs=pl.BlockSpec((tm, _LANES), lambda i, w, b: (i, 0)),
        ),
        compiler_params=pltpu.CompilerParams(
            dimension_semantics=("parallel",),
            vmem_limit_bytes=vmem_limit,
        ),
    )(w_flat, b_flat, x2d)

    # Undo the layout plumbing: drop tail padding (if any), restore shape.
    out_flat = out2d.reshape(-1)
    if padded != n:
        out_flat = out_flat[:n]
    return out_flat.reshape(orig_shape)


if __name__ == "__main__":
    key = jax.random.PRNGKey(0)
    k_w, k_b, k_x = jax.random.split(key, 3)

    # Deterministic parameter init (shapes from nn.Linear(1, 1)).
    weight = jax.random.normal(k_w, (1, 1), dtype=jnp.float32)  # (out, in)
    bias = jax.random.normal(k_b, (1,), dtype=jnp.float32)

    # Small input consistent with the forward: batch of 8 samples, 1 feature.
    x = jax.random.normal(k_x, (8, 1), dtype=jnp.float32)

    out = jax.block_until_ready(linear1(x, weight, bias))

    # Reference check against plain JAX (same math as PyTorch Linear).
    ref = x @ weight.T + bias
    assert out.shape == ref.shape
    assert jnp.allclose(out, ref, atol=1e-6, rtol=1e-6)

    print("KERNEL_OK")
</pallas_src>

<mosaic_0001>
module attributes {stable_mosaic.version = 11 : i64} {
  func.func @_affine_kernel(%arg0: i32, %arg1: memref<1xf32, #tpu.memory_space<smem>>, %arg2: memref<1xf32, #tpu.memory_space<smem>>, %arg3: memref<1x1024xf32, #tpu.memory_space<vmem>>, %arg4: memref<1x1024xf32, #tpu.memory_space<vmem>>) attributes {dimension_semantics = [#tpu.dimension_semantics<parallel>], iteration_bounds = array<i64: 1>, scalar_prefetch = 2 : i64, scratch_operands = 0 : i64, tpu.core_type = #tpu.core_type<tc>, window_params = [{transform_indices = @transform_0, window_bounds = array<i64: 1, 1024>}, {transform_indices = @transform_1, window_bounds = array<i64: 1, 1024>}]} {
    %c0 = arith.constant 0 : index
    %0 = memref.load %arg1[%c0] : memref<1xf32, #tpu.memory_space<smem>>
    %c0_0 = arith.constant 0 : index
    %1 = memref.load %arg2[%c0_0] : memref<1xf32, #tpu.memory_space<smem>>
    %c0_1 = arith.constant 0 : index
    %c0_2 = arith.constant 0 : index
    %2 = vector.load %arg3[%c0_1, %c0_2] : memref<1x1024xf32, #tpu.memory_space<vmem>>, vector<1x1024xf32>
    %3 = vector.broadcast %0 : f32 to vector<1x1024xf32>
    %4 = arith.mulf %2, %3 : vector<1x1024xf32>
    %5 = vector.broadcast %1 : f32 to vector<1x1024xf32>
    %6 = arith.addf %4, %5 : vector<1x1024xf32>
    %c0_3 = arith.constant 0 : index
    %c0_4 = arith.constant 0 : index
    %7 = vector.load %arg4[%c0_3, %c0_4] : memref<1x1024xf32, #tpu.memory_space<vmem>>, vector<1x1024xf32>
    tpu.vector_store %arg4[%c0_3, %c0_4], %6 {strides = array<i32>} : memref<1x1024xf32, #tpu.memory_space<vmem>>, vector<1x1024xf32>,
    return
  }
  func.func @transform_0(%arg0: i32, %arg1: memref<1xf32, #tpu.memory_space<smem>>, %arg2: memref<1xf32, #tpu.memory_space<smem>>) -> (i32, i32) {
    %c0_i32 = arith.constant 0 : i32
    %c0_i32_0 = arith.constant 0 : i32
    return %arg0, %c0_i32 : i32, i32
  }
  func.func @transform_1(%arg0: i32, %arg1: memref<1xf32, #tpu.memory_space<smem>>, %arg2: memref<1xf32, #tpu.memory_space<smem>>) -> (i32, i32) {
    %c0_i32 = arith.constant 0 : i32
    %c0_i32_0 = arith.constant 0 : i32
    return %arg0, %c0_i32 : i32, i32
  }
}

</mosaic_0001>

<llo_original>
// kernel: tpu_custom_call.1
$region0: #{tpu_custom_call.1}
  #allocation0 [shape = 'u32[]', space=smem, size = 0x4, offset = 0x4, fixed_abs, tag = 'smem constant byte address 0x4 - core index']
  #allocation1 [shape = 'u32[144,128]{1,0:T(1,128)}', space=vmem, size = 0x12000, scoped, tag = 'internal scratch']
  #allocation2 [shape = 's32[1]{0}', space=sflag, size = 0x4, scoped, tag = 'scoped memory for tpu_custom_call.1']
  #allocation3 [shape = 'f32[1]{0:T(128)S(6)}', space=smem, size = 0x200, scoped, tag = 'prefetched SMEM operand 0']
  #allocation4 [shape = 'f32[1]{0:T(128)S(6)}', space=smem, size = 0x200, scoped, tag = 'prefetched SMEM operand 1']
  %s0 = inlined_call_operand.<no memory space> [shape: f32[1], index: 0, kind: input, shape index: {}]
  %s1 = inlined_call_operand.<no memory space> [shape: f32[1], index: 1, kind: input, shape index: {}]
  %s2 = inlined_call_operand.hbm [shape: f32[1,1024], index: 2, kind: input, shape index: {}]
  %s3 = inlined_call_operand.hbm [shape: f32[1,1024], index: 3, kind: output, shape index: {}]
  %s4 = sld [smem:[#allocation0]]
  $region18: #{tpu_custom_call.1} parent=0
    _
  %s6 = ssub.s32 1, %s4
  %s7 = scalar_select 0, %s6, %s4
  %8 = sst [smem:[#allocation3]] %s0
  %9 = sst [smem:[#allocation4]] %s1
  $region1: #{tpu_custom_call.1} parent=0
    #allocation5 [shape = 'u8[4096]{0}', space=vmem, size = 0x1000, scoped, tag = 'input window, operand 2, single buffered']
    #allocation6 [shape = 's32[1]{0}', space=sflag, size = 0x4, scoped, tag = 'scoped memory for tpu_custom_call.1']
    #allocation7 [shape = 's32[1]{0}', space=sflag, size = 0x4, scoped, tag = 'scoped memory for tpu_custom_call.1']
    #allocation8 [shape = 'u8[4096]{0}', space=vmem, size = 0x1000, scoped, tag = 'output window, operand 0, single buffered']
    %10 = vsyncpa [#allocation6], 0
    %11 = vsyncpa [#allocation7], 0
    // Predicated region
    $region2: #{tpu_custom_call.1} parent=1 // pred_check
      _
    $region3: #{tpu_custom_call.1} parent=1 // pred_check_branch
      %13 = sbr.rel (0) target = $region5
    $region4: #{tpu_custom_call.1} parent=1 // pred_region
      %s15 = ssub.s32 128, 128
      %16 = vsyncadd [#allocation6], %s15
      %s18 = sshll.u32 [#allocation5], 4
      %s19 = int_to_ptr.vmem [resolvable:$true] %s18
      %21 = dma.hbm_to_vmem [thread:$0]  %s2, 128, %s19, [#allocation6]
    $region5: #{tpu_custom_call.1} parent=1 // pred_fallthru
      _
    // Predicated region
    $region6: #{tpu_custom_call.1} parent=1 // pred_check
      _
    $region7: #{tpu_custom_call.1} parent=1 // pred_check_branch
      %23 = sbr.rel (0) target = $region9
    $region8: #{tpu_custom_call.1} parent=1 // pred_region
      %24 = dma.done [#allocation6], 128
    $region9: #{tpu_custom_call.1} parent=1 // pred_fallthru
      _
    %s25 = sld [smem:[#allocation3]]
    %s26 = sld [smem:[#allocation4]]
    %v27 = vld [vmem:[#allocation5] sm:$0xff]
    %v28 = vstv %s25
    %v29 = vmul.f32 %v27, %v28
    %v30 = vstv %s26
    %v31 = vadd.f32 %v29, %v30
    %32 = vst [vmem:[#allocation8] sm:$0xff] %v31
    // Predicated region
    $region10: #{tpu_custom_call.1} parent=1 // pred_check
      _
    $region11: #{tpu_custom_call.1} parent=1 // pred_check_branch
      %34 = sbr.rel (0) target = $region13
    $region12: #{tpu_custom_call.1} parent=1 // pred_region
      %s36 = ssub.s32 128, 128
      %37 = vsyncadd [#allocation7], %s36
      %s39 = sshll.u32 [#allocation8], 4
      %s40 = int_to_ptr.vmem [resolvable:$true] %s39
      %42 = dma.vmem_to_hbm [thread:$0]  %s40, 128, %s3, [#allocation7]
    $region13: #{tpu_custom_call.1} parent=1 // pred_fallthru
      _
    // Predicated region
    $region14: #{tpu_custom_call.1} parent=1 // pred_check
      _
    $region15: #{tpu_custom_call.1} parent=1 // pred_check_branch
      %44 = sbr.rel (0) target = $region17
    $region16: #{tpu_custom_call.1} parent=1 // pred_region
      %45 = dma.done [#allocation7], 128
    $region17: #{tpu_custom_call.1} parent=1 // pred_fallthru
      _
    %46 = vsyncpa [#allocation6], 1
    %47 = vsyncpa [#allocation7], 1

</llo_original>
